<compile_context>
chip_gen: v7x
topology: tpu7x:2x2x1
jax: 0.10.0
libtpu: 0.0.40
codegen_flags: <defaults>
</compile_context>

<pallas_src>
import math

import jax
import jax.numpy as jnp
from jax.experimental import pallas as pl
from jax.experimental.pallas import tpu as pltpu

LANES = 128
# 1024 rows * 128 lanes * 4 B = 512 KiB per f32 input buffer;
# 3 inputs * 2 pipeline buffers = 3 MiB -> comfortably under the scoped-VMEM
# defaults on v5e (16 MiB), v6e (32 MiB) and v7x (32 MiB of 64 MiB physical).
MAX_TILE_ROWS = 1024


def _round_up(x, m):
    return ((x + m - 1) // m) * m


def _kl_loss_kernel(inp_ref, tgt_ref, sm_ref, out_ref):
    # out_ref is an (8, 128) f32 partial-sum block, resident across the inner
    # (reduction) grid axis.  Zero it on the first reduction step.
    @pl.when(pl.program_id(1) == 0)
    def _():
        out_ref[...] = jnp.zeros_like(out_ref)

    inp = inp_ref[...].astype(jnp.float32)
    tgt = tgt_ref[...].astype(jnp.float32)
    s = sm_ref[...].astype(jnp.float32)

    # torch.where(torch.isnan(target), input, target)
    tgt = jnp.where(jnp.isnan(tgt), inp, tgt)
    diff = inp - tgt
    loss_elem = 0.5 * (jnp.exp(-s) * diff * diff + s)

    # Fold (tile_rows, 128) -> (8, 128) with shape-preserving elementwise (VPU)
    # adds; the one cross-sublane/cross-lane reduce happens once in the wrapper.
    tile_rows = loss_elem.shape[0]
    out_ref[...] += loss_elem.reshape(tile_rows // 8, 8, LANES).sum(axis=0)


def kl_loss_forward(inp, target, sm, weights=None, *, max_tile_rows=MAX_TILE_ROWS):
    """JAX/Pallas equivalent of KLLoss.forward. Returns a scalar f32 loss."""
    assert inp.shape == target.shape == sm.shape
    assert inp.shape[-1] >= 2

    # Feed the kernel in the native (narrow) dtype when possible; upcast to f32
    # inside the kernel -> halves HBM traffic for bf16 models.
    if (inp.dtype == target.dtype == sm.dtype) and inp.dtype in (jnp.float32, jnp.bfloat16):
        feed_dtype = inp.dtype
    else:
        feed_dtype = jnp.float32
    itemsize = jnp.dtype(feed_dtype).itemsize
    sublane = 8 if itemsize == 4 else 16  # (8,128) tiles for 4B, (16,128) for 2B

    # ---- repack to a lane-dense [padded_rows, 128] slab ---------------------
    n_elem = 2 * math.prod(inp.shape[:-1])
    rows = _round_up(max(n_elem, 1), LANES) // LANES
    tile_rows = min(max(max_tile_rows, sublane), _round_up(rows, sublane))
    tile_rows = _round_up(tile_rows, sublane)
    num_tiles = _round_up(rows, tile_rows) // tile_rows
    num_splits = 2 if num_tiles >= 2 else 1          # v7x: shard over 2 TensorCores
    tiles_per_split = _round_up(num_tiles, num_splits) // num_splits
    padded_rows = num_splits * tiles_per_split * tile_rows
    padded_elems = padded_rows * LANES

    def repack(x):
        x = x[..., :2].reshape(-1)
        if x.dtype != feed_dtype:
            x = x.astype(feed_dtype)
        pad = padded_elems - n_elem
        if pad:
            x = jnp.pad(x, (0, pad))  # zero padding contributes exactly 0 to the loss
        return x.reshape(padded_rows, LANES)

    inp_r, tgt_r, sm_r = repack(inp), repack(target), repack(sm)

    in_spec = pl.BlockSpec((tile_rows, LANES),
                           lambda c, i: (c * tiles_per_split + i, 0))
    out_spec = pl.BlockSpec((8, LANES), lambda c, i: (c, 0))

    partials = pl.pallas_call(
        _kl_loss_kernel,
        out_shape=jax.ShapeDtypeStruct((num_splits * 8, LANES), jnp.float32),
        grid=(num_splits, tiles_per_split),
        in_specs=[in_spec, in_spec, in_spec],
        out_specs=out_spec,
        compiler_params=pltpu.CompilerParams(
            dimension_semantics=("parallel", "arbitrary")),
        cost_estimate=pl.CostEstimate(
            flops=8 * padded_elems,
            transcendentals=padded_elems,
            bytes_accessed=3 * padded_elems * itemsize + num_splits * 8 * LANES * 4),
    )(inp_r, tgt_r, sm_r)

    loss = jnp.sum(partials)  # single final cross-lane reduction (tiny, XLA-side)

    if weights is not None:
        # TODO(synk): the reference `weights` branch indexes loss.shape[0/1] on a
        # 0-d tensor and would raise for any weights; not implemented here.
        raise NotImplementedError("weights path is inconsistent in the reference module")
    return loss


def _reference(inp, target, sm):
    target = jnp.where(jnp.isnan(target), inp, target)
    diff = inp[..., :2] - target[..., :2]
    s = sm[..., :2]
    return jnp.sum(0.5 * (jnp.exp(-s) * diff ** 2 + s))


if __name__ == "__main__":
    key = jax.random.PRNGKey(0)
    k1, k2, k3, k4 = jax.random.split(key, 4)

    # Small shape consistent with the module: 16 boxes x 7 box params (xy used).
    B, D = 16, 7
    inp = jax.random.normal(k1, (B, D), dtype=jnp.float32)
    target = jax.random.normal(k2, (B, D), dtype=jnp.float32)
    sm = 0.1 * jax.random.normal(k3, (B, D), dtype=jnp.float32)
    # Inject NaNs into target to exercise the where(isnan(...)) path.
    target = jnp.where(jax.random.bernoulli(k4, 0.2, (B, D)), jnp.nan, target)

    loss = kl_loss_forward(inp, target, sm)
    jax.block_until_ready(loss)
    ref = _reference(inp, target, sm)
    assert jnp.allclose(loss, ref, rtol=1e-4, atol=1e-4), (loss, ref)

    # Second small case exercising the multi-tile grid, the 2-way split and the
    # padded ragged tail (max_tile_rows shrunk so the path triggers at small N).
    k5, k6, k7, k8 = jax.random.split(key, 4)[0], *jax.random.split(jax.random.PRNGKey(0), 3)
    shape = (8, 40, 7)  # 2*8*40 = 640 elements -> 5 rows of 128 lanes
    inp2 = jax.random.normal(k6, shape, dtype=jnp.float32)
    target2 = jax.random.normal(k7, shape, dtype=jnp.float32)
    sm2 = 0.1 * jax.random.normal(k8, shape, dtype=jnp.float32)
    target2 = jnp.where(jax.random.bernoulli(k5, 0.1, shape), jnp.nan, target2)

    loss2 = kl_loss_forward(inp2, target2, sm2, max_tile_rows=8)
    jax.block_until_ready(loss2)
    ref2 = _reference(inp2, target2, sm2)
    assert jnp.allclose(loss2, ref2, rtol=1e-4, atol=1e-4), (loss2, ref2)

    print("KERNEL_OK")
</pallas_src>

<mosaic_0001>
module attributes {stable_mosaic.version = 11 : i64} {
  func.func @_kl_loss_kernel(%arg0: i32, %arg1: i32, %arg2: memref<8x128xf32, #tpu.memory_space<vmem>>, %arg3: memref<8x128xf32, #tpu.memory_space<vmem>>, %arg4: memref<8x128xf32, #tpu.memory_space<vmem>>, %arg5: memref<8x128xf32, #tpu.memory_space<vmem>>) attributes {dimension_semantics = [#tpu.dimension_semantics<parallel>, #tpu.dimension_semantics<arbitrary>], iteration_bounds = array<i64: 1, 1>, scalar_prefetch = 0 : i64, scratch_operands = 0 : i64, tpu.core_type = #tpu.core_type<tc>, window_params = [{transform_indices = @transform_0, window_bounds = array<i64: 8, 128>}, {transform_indices = @transform_1, window_bounds = array<i64: 8, 128>}, {transform_indices = @transform_2, window_bounds = array<i64: 8, 128>}, {transform_indices = @transform_3, window_bounds = array<i64: 8, 128>}]} {
    %c0_i32 = arith.constant 0 : i32
    %0 = arith.cmpi eq, %arg1, %c0_i32 : i32
    %1 = arith.extui %0 : i1 to i32
    %c0_i32_0 = arith.constant 0 : i32
    %2 = arith.cmpi ne, %1, %c0_i32_0 : i32
    scf.if %2 {
      %cst_12 = arith.constant 0.000000e+00 : f32
      %22 = vector.broadcast %cst_12 : f32 to vector<8x128xf32>
      %c0_13 = arith.constant 0 : index
      %c0_14 = arith.constant 0 : index
      %23 = vector.load %arg5[%c0_13, %c0_14] : memref<8x128xf32, #tpu.memory_space<vmem>>, vector<8x128xf32>
      tpu.vector_store %arg5[%c0_13, %c0_14], %22 {strides = array<i32>} : memref<8x128xf32, #tpu.memory_space<vmem>>, vector<8x128xf32>,
    } else {
    }
    %c0 = arith.constant 0 : index
    %c0_1 = arith.constant 0 : index
    %3 = vector.load %arg2[%c0, %c0_1] : memref<8x128xf32, #tpu.memory_space<vmem>>, vector<8x128xf32>
    %c0_2 = arith.constant 0 : index
    %c0_3 = arith.constant 0 : index
    %4 = vector.load %arg3[%c0_2, %c0_3] : memref<8x128xf32, #tpu.memory_space<vmem>>, vector<8x128xf32>
    %c0_4 = arith.constant 0 : index
    %c0_5 = arith.constant 0 : index
    %5 = vector.load %arg4[%c0_4, %c0_5] : memref<8x128xf32, #tpu.memory_space<vmem>>, vector<8x128xf32>
    %6 = arith.cmpf one, %4, %4 : vector<8x128xf32>
    %7 = arith.select %6, %3, %4 : vector<8x128xi1>, vector<8x128xf32>
    %8 = arith.subf %3, %7 : vector<8x128xf32>
    %cst = arith.constant 0.000000e+00 : f32
    %9 = vector.broadcast %cst : f32 to vector<8x128xf32>
    %10 = arith.subf %9, %5 : vector<8x128xf32>
    %11 = math.exp %10 : vector<8x128xf32>
    %12 = arith.mulf %11, %8 : vector<8x128xf32>
    %13 = arith.mulf %12, %8 : vector<8x128xf32>
    %14 = arith.addf %13, %5 : vector<8x128xf32>
    %cst_6 = arith.constant 5.000000e-01 : f32
    %15 = vector.broadcast %cst_6 : f32 to vector<8x128xf32>
    %16 = arith.mulf %15, %14 : vector<8x128xf32>
    %c0_7 = arith.constant 0 : index
    %c0_8 = arith.constant 0 : index
    %17 = vector.load %arg5[%c0_7, %c0_8] : memref<8x128xf32, #tpu.memory_space<vmem>>, vector<8x128xf32>
    %18 = vector.shape_cast %16 : vector<8x128xf32> to vector<1x8x128xf32>
    %cst_9 = arith.constant dense<0.000000e+00> : vector<8x128xf32>
    %19 = vector.multi_reduction <add>, %18, %cst_9 [0] : vector<1x8x128xf32> to vector<8x128xf32>
    %20 = arith.addf %17, %19 : vector<8x128xf32>
    %c0_10 = arith.constant 0 : index
    %c0_11 = arith.constant 0 : index
    %21 = vector.load %arg5[%c0_10, %c0_11] : memref<8x128xf32, #tpu.memory_space<vmem>>, vector<8x128xf32>
    tpu.vector_store %arg5[%c0_10, %c0_11], %20 {strides = array<i32>} : memref<8x128xf32, #tpu.memory_space<vmem>>, vector<8x128xf32>,
    return
  }
  func.func @transform_0(%arg0: i32, %arg1: i32) -> (i32, i32) {
    %c1_i32 = arith.constant 1 : i32
    %0 = arith.muli %arg0, %c1_i32 : i32
    %1 = arith.addi %0, %arg1 : i32
    %c0_i32 = arith.constant 0 : i32
    %c0_i32_0 = arith.constant 0 : i32
    return %1, %c0_i32 : i32, i32
  }
  func.func @transform_1(%arg0: i32, %arg1: i32) -> (i32, i32) {
    %c1_i32 = arith.constant 1 : i32
    %0 = arith.muli %arg0, %c1_i32 : i32
    %1 = arith.addi %0, %arg1 : i32
    %c0_i32 = arith.constant 0 : i32
    %c0_i32_0 = arith.constant 0 : i32
    return %1, %c0_i32 : i32, i32
  }
  func.func @transform_2(%arg0: i32, %arg1: i32) -> (i32, i32) {
    %c1_i32 = arith.constant 1 : i32
    %0 = arith.muli %arg0, %c1_i32 : i32
    %1 = arith.addi %0, %arg1 : i32
    %c0_i32 = arith.constant 0 : i32
    %c0_i32_0 = arith.constant 0 : i32
    return %1, %c0_i32 : i32, i32
  }
  func.func @transform_3(%arg0: i32, %arg1: i32) -> (i32, i32) {
    %c0_i32 = arith.constant 0 : i32
    %c0_i32_0 = arith.constant 0 : i32
    return %arg0, %c0_i32 : i32, i32
  }
}

</mosaic_0001>

<llo_original>
// kernel: tpu_custom_call.1
$region0: #{tpu_custom_call.1}
  #allocation0 [shape = 'u32[]', space=smem, size = 0x4, offset = 0x4, fixed_abs, tag = 'smem constant byte address 0x4 - core index']
  #allocation1 [shape = 'u32[144,128]{1,0:T(1,128)}', space=vmem, size = 0x12000, scoped, tag = 'internal scratch']
  %s0 = inlined_call_operand.hbm [shape: f32[8,128], index: 0, kind: input, shape index: {}]
  %s1 = inlined_call_operand.hbm [shape: f32[8,128], index: 1, kind: input, shape index: {}]
  %s2 = inlined_call_operand.hbm [shape: f32[8,128], index: 2, kind: input, shape index: {}]
  %s3 = inlined_call_operand.hbm [shape: f32[8,128], index: 3, kind: output, shape index: {}]
  %s4 = sld [smem:[#allocation0]]
  $region38: #{tpu_custom_call.1} parent=0
    _
  %s6 = ssub.s32 1, %s4
  %s7 = scalar_select 0, %s6, %s4
  $region1: #{tpu_custom_call.1} parent=0
    #allocation2 [shape = 'u8[4096]{0}', space=vmem, size = 0x1000, scoped, tag = 'input window, operand 0, single buffered']
    #allocation3 [shape = 's32[1]{0}', space=sflag, size = 0x4, scoped, tag = 'scoped memory for tpu_custom_call.1']
    #allocation4 [shape = 's32[1]{0}', space=sflag, size = 0x4, scoped, tag = 'scoped memory for tpu_custom_call.1']
    #allocation5 [shape = 'u8[4096]{0}', space=vmem, size = 0x1000, scoped, tag = 'input window, operand 1, single buffered']
    #allocation6 [shape = 's32[1]{0}', space=sflag, size = 0x4, scoped, tag = 'scoped memory for tpu_custom_call.1']
    #allocation7 [shape = 'u8[4096]{0}', space=vmem, size = 0x1000, scoped, tag = 'input window, operand 2, single buffered']
    #allocation8 [shape = 'u8[4096]{0}', space=vmem, size = 0x1000, scoped, tag = 'output window, operand 0, single buffered']
    %8 = vsyncpa [#allocation3], 0
    %9 = vsyncpa [#allocation6], 0
    %10 = vsyncpa [#allocation4], 0
    // Predicated region
    $region2: #{tpu_custom_call.1} parent=1 // pred_check
      _
    $region3: #{tpu_custom_call.1} parent=1 // pred_check_branch
      %12 = sbr.rel (0) target = $region5
    $region4: #{tpu_custom_call.1} parent=1 // pred_region
      %s13 = sadd.s32 0, 0
      %s15 = ssub.s32 128, 128
      %16 = vsyncadd [#allocation3], %s15
      %s17 = smul.addr %s13, 128
      %s18 = scalar_lea.hbm %s0, %s17
      %s20 = sshll.u32 [#allocation2], 4
      %s21 = int_to_ptr.vmem [resolvable:$true] %s20
      %23 = dma.hbm_to_vmem [thread:$0]  %s18, 128, %s21, [#allocation3]
    $region5: #{tpu_custom_call.1} parent=1 // pred_fallthru
      _
    // Predicated region
    $region6: #{tpu_custom_call.1} parent=1 // pred_check
      _
    $region7: #{tpu_custom_call.1} parent=1 // pred_check_branch
      %25 = sbr.rel (0) target = $region9
    $region8: #{tpu_custom_call.1} parent=1 // pred_region
      %s26 = sadd.s32 0, 0
      %s28 = ssub.s32 128, 128
      %29 = vsyncadd [#allocation6], %s28
      %s30 = smul.addr %s26, 128
      %s31 = scalar_lea.hbm %s1, %s30
      %s33 = sshll.u32 [#allocation5], 4
      %s34 = int_to_ptr.vmem [resolvable:$true] %s33
      %36 = dma.hbm_to_vmem [thread:$0]  %s31, 128, %s34, [#allocation6]
    $region9: #{tpu_custom_call.1} parent=1 // pred_fallthru
      _
    // Predicated region
    $region10: #{tpu_custom_call.1} parent=1 // pred_check
      _
    $region11: #{tpu_custom_call.1} parent=1 // pred_check_branch
      %38 = sbr.rel (0) target = $region13
    $region12: #{tpu_custom_call.1} parent=1 // pred_region
      %s39 = sadd.s32 0, 0
      %s41 = ssub.s32 128, 128
      %42 = vsyncadd [#allocation6], %s41
      %s43 = smul.addr %s39, 128
      %s44 = scalar_lea.hbm %s2, %s43
      %s46 = sshll.u32 [#allocation7], 4
      %s47 = int_to_ptr.vmem [resolvable:$true] %s46
      %49 = dma.hbm_to_vmem [thread:$0]  %s44, 128, %s47, [#allocation6]
    $region13: #{tpu_custom_call.1} parent=1 // pred_fallthru
      _
    // Predicated region
    $region14: #{tpu_custom_call.1} parent=1 // pred_check
      _
    $region15: #{tpu_custom_call.1} parent=1 // pred_check_branch
      %51 = sbr.rel (0) target = $region17
    $region16: #{tpu_custom_call.1} parent=1 // pred_region
      %52 = dma.done [#allocation3], 128
    $region17: #{tpu_custom_call.1} parent=1 // pred_fallthru
      _
    // Predicated region
    $region18: #{tpu_custom_call.1} parent=1 // pred_check
      _
    $region19: #{tpu_custom_call.1} parent=1 // pred_check_branch
      %54 = sbr.rel (0) target = $region21
    $region20: #{tpu_custom_call.1} parent=1 // pred_region
      %55 = dma.done [#allocation6], 128
    $region21: #{tpu_custom_call.1} parent=1 // pred_fallthru
      _
    // Predicated region
    $region22: #{tpu_custom_call.1} parent=1 // pred_check
      _
    $region23: #{tpu_custom_call.1} parent=1 // pred_check_branch
      %57 = sbr.rel (0) target = $region25
    $region24: #{tpu_custom_call.1} parent=1 // pred_region
      %58 = dma.done [#allocation6], 128
    $region25: #{tpu_custom_call.1} parent=1 // pred_fallthru
      _
    %s59 = sadd.s32 0, 0
    %s60 = sadd.s32 0, 0
    %s61 = sadd.s32 0, 0
    %p62 = scmp.eq.s32.totalorder 0, 0
    // Predicated region
    $region26: #{tpu_custom_call.1} parent=1 // pred_check
      %p63 = pneg %p62
    $region27: #{tpu_custom_call.1} parent=1 // pred_check_branch
      %65 = sbr.rel (%p63) target = $region29
    $region28: #{tpu_custom_call.1} parent=1 // pred_region
      %66 = vst [vmem:[#allocation8] sm:$0xff] 0.0
    $region29: #{tpu_custom_call.1} parent=1 // pred_fallthru
      _
    %v67 = vld [vmem:[#allocation2] sm:$0xff]
    %v68 = vld [vmem:[#allocation5] sm:$0xff]
    %v69 = vld [vmem:[#allocation7] sm:$0xff]
    %vm70 = vcmp.ne.f32.partialorder %v68, %v68
    %v71 = vsel %vm70, %v67, %v68
    %v72 = vsub.f32 %v67, %v71
    %v73 = vsub.f32 0.0, %v69
    %v74 = vmul.f32 %v73, 1.442695
    %v75 = vpow.pop %v74
    %v76 = vmul.f32 %v75, %v72
    %v77 = vmul.f32 %v76, %v72
    %v78 = vadd.f32 %v77, %v69
    %v79 = vmul.f32 %v78, 0.5
    %v80 = vld [vmem:[#allocation8] sm:$0xff]
    %v81 = vadd.f32 %v79, 0.0
    %v82 = vadd.f32 %v80, %v81
    %83 = vst [vmem:[#allocation8] sm:$0xff] %v82
    // Predicated region
    $region30: #{tpu_custom_call.1} parent=1 // pred_check
      _
    $region31: #{tpu_custom_call.1} parent=1 // pred_check_branch
      %85 = sbr.rel (0) target = $region33
    $region32: #{tpu_custom_call.1} parent=1 // pred_region
      %s87 = ssub.s32 128, 128
      %88 = vsyncadd [#allocation4], %s87
      %s90 = sshll.u32 [#allocation8], 4
      %s91 = int_to_ptr.vmem [resolvable:$true] %s90
      %93 = dma.vmem_to_hbm [thread:$0]  %s91, 128, %s3, [#allocation4]
    $region33: #{tpu_custom_call.1} parent=1 // pred_fallthru
      _
    // Predicated region
    $region34: #{tpu_custom_call.1} parent=1 // pred_check
      _
    $region35: #{tpu_custom_call.1} parent=1 // pred_check_branch
      %95 = sbr.rel (0) target = $region37
    $region36: #{tpu_custom_call.1} parent=1 // pred_region
      %96 = dma.done [#allocation4], 128
    $region37: #{tpu_custom_call.1} parent=1 // pred_fallthru
      _
    %97 = vsyncpa [#allocation3], 1
    %98 = vsyncpa [#allocation6], 1
    %99 = vsyncpa [#allocation4], 1

</llo_original>
